<compile_context>
chip_gen: v7x
topology: tpu7x:2x2x1
jax: 0.10.0
libtpu: 0.0.40
codegen_flags: <defaults>
</compile_context>

<pallas_src>
import jax
import jax.numpy as jnp
from jax.experimental import pallas as pl
from jax.experimental.pallas import tpu as pltpu


def _round_up(x, m):
    return ((x + m - 1) // m) * m


def _conv_gemm_bias_kernel(a_ref, w_ref, b_ref, o_ref):
    # a_ref: (KKC_pad, TM)   bf16 im2col panel: contraction on sublanes, pixels on lanes
    # w_ref: (Cmid, KKC_pad) bf16 conv weights: contraction on lanes (resident across grid)
    # b_ref: (Cmid, 1)       f32 bias column (broadcast over lanes)
    # o_ref: (Cmid, TM)      f32 conv output: channels on sublanes, pixels on lanes (lane-dense)
    o_ref[...] = (
        jnp.dot(w_ref[...], a_ref[...], preferred_element_type=jnp.float32)
        + b_ref[...]
    )


def _pick_tm(m, kkc_pad, cmid):
    """Largest lane tile that fits a modest VMEM budget (double-buffered A + out blocks)."""
    m128 = _round_up(m, 128)
    vmem_budget = 8 * 1024 * 1024  # well under default scoped limits on v5e/v6e/v7x
    bytes_per_lane_col = 2 * (kkc_pad * 2 + cmid * 4)  # 2x double-buffer, bf16 in / f32 out
    tm_max = max(128, (vmem_budget // bytes_per_lane_col) // 128 * 128)
    return min(2048, tm_max, m128)


def _conv_gemm_pallas(patches, w_t, bias_col, tm):
    """patches: (N, KKC_pad, M_pad) bf16; w_t: (Cmid, KKC_pad) bf16; bias_col: (Cmid, 1) f32."""
    n, kkc_pad, m_pad = patches.shape
    cmid = w_t.shape[0]
    grid = (n, m_pad // tm)
    return pl.pallas_call(
        _conv_gemm_bias_kernel,
        out_shape=jax.ShapeDtypeStruct((n, cmid, m_pad), jnp.float32),
        grid_spec=pltpu.PrefetchScalarGridSpec(
            num_scalar_prefetch=0,
            grid=grid,
            in_specs=[
                # Batch dim squeezed out of the kernel view; full-extent contraction block.
                pl.BlockSpec((pl.Squeezed(), kkc_pad, tm), lambda b, mi: (b, 0, mi)),
                pl.BlockSpec((cmid, kkc_pad), lambda b, mi: (0, 0)),
                pl.BlockSpec((cmid, 1), lambda b, mi: (0, 0)),
            ],
            out_specs=pl.BlockSpec((pl.Squeezed(), cmid, tm), lambda b, mi: (b, 0, mi)),
        ),
        compiler_params=pltpu.CompilerParams(
            dimension_semantics=("parallel", "parallel"),
        ),
    )(patches, w_t, bias_col)


def pixel_shuffle_block(x_nchw, weight_oikk, bias, upscale_factor, padding=1):
    """Forward pass of PixelShuffleBlock. Input/output in NCHW (PyTorch convention)."""
    n, cin, h, w = x_nchw.shape
    cmid, _, k, _ = weight_oikk.shape
    r = upscale_factor
    cout = cmid // (r * r)
    # The im2col below assumes a 'same' convolution (output spatial size == input).
    assert padding == (k - 1) // 2, "pixel_shuffle_block requires padding == (kernel-1)//2"

    # ---- im2col (index shuffling only; H,W stay the contiguous minor dims, no transpose) ----
    x_bf = x_nchw.astype(jnp.bfloat16)
    x_pad = jnp.pad(x_bf, ((0, 0), (0, 0), (padding, padding), (padding, padding)))
    taps = [x_pad[:, :, kh:kh + h, kw:kw + w] for kh in range(k) for kw in range(k)]
    patches = jnp.stack(taps, axis=1)                 # (N, K*K, Cin, H, W)
    kkc = k * k * cin
    m = h * w
    patches = patches.reshape(n, kkc, m)              # (N, K*K*Cin, H*W), contiguous reshape

    # Pad contraction only to a sublane multiple (8), lanes up to the M tile.
    kkc_pad = _round_up(kkc, 8)
    tm = _pick_tm(m, kkc_pad, cmid)
    m_pad = _round_up(m, tm)
    patches = jnp.pad(patches, ((0, 0), (0, kkc_pad - kkc), (0, m_pad - m)))

    # Weights (Cmid, Cin, K, K) -> (Cmid, K*K*Cin) with column order (kh, kw, c) matching rows.
    w_t = jnp.transpose(weight_oikk, (0, 2, 3, 1)).reshape(cmid, kkc)
    w_t = jnp.pad(w_t, ((0, 0), (0, kkc_pad - kkc))).astype(jnp.bfloat16)
    bias_col = bias.reshape(cmid, 1).astype(jnp.float32)

    conv = _conv_gemm_pallas(patches, w_t, bias_col, tm)      # (N, Cmid, M_pad) f32
    conv = conv[:, :, :m].reshape(n, cmid, h, w)

    # ---- PixelShuffle (index shuffling): cmid = c*r^2 + dy*r + dx ----
    y = conv.reshape(n, cout, r, r, h, w)
    y = jnp.transpose(y, (0, 1, 4, 2, 5, 3))                  # (N, Cout, H, r, W, r)
    return y.reshape(n, cout, h * r, w * r)


if __name__ == "__main__":
    # Small shapes consistent with the module: in_channel=4, out_channel=4, r=2
    N, Cin, H, W = 2, 4, 16, 16
    out_channel, r, K = 4, 2, 3
    Cmid = out_channel * r * r

    key = jax.random.PRNGKey(0)
    kx, kw_, kb = jax.random.split(key, 3)
    x = jax.random.normal(kx, (N, Cin, H, W), dtype=jnp.float32)
    # Deterministic synthetic parameters (Conv2d-like init scale)
    fan_in = Cin * K * K
    bound = 1.0 / (fan_in ** 0.5)
    weight = jax.random.uniform(kw_, (Cmid, Cin, K, K), jnp.float32, -bound, bound)
    bias = jax.random.uniform(kb, (Cmid,), jnp.float32, -bound, bound)

    out = pixel_shuffle_block(x, weight, bias, upscale_factor=r, padding=1)
    out = jax.block_until_ready(out)

    # Sanity: shape matches PyTorch PixelShuffleBlock output (N, out_channel, H*r, W*r)
    assert out.shape == (N, out_channel, H * r, W * r), out.shape

    # Cross-check against a pure-JAX f32 reference (lax conv + pixel shuffle).
    # Tolerance loosened since the kernel streams bf16 operands (f32 accumulation).
    ref_conv = jax.lax.conv_general_dilated(
        x, weight, window_strides=(1, 1), padding=((1, 1), (1, 1)),
        dimension_numbers=("NCHW", "OIHW", "NCHW"))
    ref_conv = ref_conv + bias.reshape(1, Cmid, 1, 1)
    ref = ref_conv.reshape(N, out_channel, r, r, H, W)
    ref = jnp.transpose(ref, (0, 1, 4, 2, 5, 3)).reshape(N, out_channel, H * r, W * r)
    assert jnp.allclose(out, ref, atol=3e-2, rtol=3e-2), float(jnp.max(jnp.abs(out - ref)))

    print("KERNEL_OK")
</pallas_src>

<mosaic_0001>
module attributes {stable_mosaic.version = 11 : i64} {
  func.func @_conv_gemm_bias_kernel(%arg0: i32, %arg1: i32, %arg2: memref<1x40x256xbf16, #tpu.memory_space<vmem>>, %arg3: memref<16x40xbf16, #tpu.memory_space<vmem>>, %arg4: memref<16x1xf32, #tpu.memory_space<vmem>>, %arg5: memref<1x16x256xf32, #tpu.memory_space<vmem>>) attributes {dimension_semantics = [#tpu.dimension_semantics<parallel>, #tpu.dimension_semantics<parallel>], iteration_bounds = array<i64: 2, 1>, scalar_prefetch = 0 : i64, scratch_operands = 0 : i64, tpu.core_type = #tpu.core_type<tc>, window_params = [{transform_indices = @transform_0, window_bounds = array<i64: 1, 40, 256>}, {pipeline_mode = #tpu.pipeline_mode<synchronous>, transform_indices = @transform_1, window_bounds = array<i64: 16, 40>}, {pipeline_mode = #tpu.pipeline_mode<synchronous>, transform_indices = @transform_2, window_bounds = array<i64: 16, 1>}, {transform_indices = @transform_3, window_bounds = array<i64: 1, 16, 256>}]} {
    %c0 = arith.constant 0 : index
    %c0_0 = arith.constant 0 : index
    %0 = vector.load %arg3[%c0, %c0_0] : memref<16x40xbf16, #tpu.memory_space<vmem>>, vector<16x40xbf16>
    %c0_1 = arith.constant 0 : index
    %c0_2 = arith.constant 0 : index
    %c0_3 = arith.constant 0 : index
    %1 = vector.load %arg2[%c0_1, %c0_2, %c0_3] : memref<1x40x256xbf16, #tpu.memory_space<vmem>>, vector<1x40x256xbf16>
    %2 = vector.shape_cast %1 : vector<1x40x256xbf16> to vector<40x256xbf16>
    %cst = arith.constant dense<0.000000e+00> : vector<16x256xf32>
    %3 = tpu.matmul %0, %2, %cst {dimension_numbers = #tpu.dot_dimension_numbers<[1], [0], [0], [1], [0, 0, 1, 1], [], []>} : vector<16x40xbf16>, vector<40x256xbf16>, vector<16x256xf32> -> vector<16x256xf32>
    %c0_4 = arith.constant 0 : index
    %c0_5 = arith.constant 0 : index
    %4 = vector.load %arg4[%c0_4, %c0_5] : memref<16x1xf32, #tpu.memory_space<vmem>>, vector<16x1xf32>
    %5 = vector.broadcast %4 : vector<16x1xf32> to vector<16x256xf32>
    %6 = arith.addf %3, %5 : vector<16x256xf32>
    %c0_6 = arith.constant 0 : index
    %c0_7 = arith.constant 0 : index
    %c0_8 = arith.constant 0 : index
    %7 = vector.load %arg5[%c0_6, %c0_7, %c0_8] : memref<1x16x256xf32, #tpu.memory_space<vmem>>, vector<1x16x256xf32>
    %8 = vector.shape_cast %7 : vector<1x16x256xf32> to vector<16x256xf32>
    %9 = vector.shape_cast %6 : vector<16x256xf32> to vector<1x16x256xf32>
    tpu.vector_store %arg5[%c0_6, %c0_7, %c0_8], %9 {strides = array<i32>} : memref<1x16x256xf32, #tpu.memory_space<vmem>>, vector<1x16x256xf32>,
    return
  }
  func.func @transform_0(%arg0: i32, %arg1: i32) -> (i32, i32, i32) {
    %c0_i32 = arith.constant 0 : i32
    %c0_i32_0 = arith.constant 0 : i32
    return %arg0, %c0_i32, %arg1 : i32, i32, i32
  }
  func.func @transform_1(%arg0: i32, %arg1: i32) -> (i32, i32) {
    %c0_i32 = arith.constant 0 : i32
    %c0_i32_0 = arith.constant 0 : i32
    %c0_i32_1 = arith.constant 0 : i32
    return %c0_i32, %c0_i32_0 : i32, i32
  }
  func.func @transform_2(%arg0: i32, %arg1: i32) -> (i32, i32) {
    %c0_i32 = arith.constant 0 : i32
    %c0_i32_0 = arith.constant 0 : i32
    %c0_i32_1 = arith.constant 0 : i32
    return %c0_i32, %c0_i32_0 : i32, i32
  }
  func.func @transform_3(%arg0: i32, %arg1: i32) -> (i32, i32, i32) {
    %c0_i32 = arith.constant 0 : i32
    %c0_i32_0 = arith.constant 0 : i32
    return %arg0, %c0_i32, %arg1 : i32, i32, i32
  }
}

</mosaic_0001>

<llo_original>
// kernel: tpu_custom_call.1
$region0: #{tpu_custom_call.1}
  #allocation0 [shape = 'u32[]', space=smem, size = 0x4, offset = 0x4, fixed_abs, tag = 'smem constant byte address 0x4 - core index']
  #allocation1 [shape = 'u32[144,128]{1,0:T(1,128)}', space=vmem, size = 0x12000, scoped, tag = 'internal scratch']
  %s0 = inlined_call_operand.hbm [shape: bf16[2,40,256], index: 0, kind: input, shape index: {}]
  %s1 = inlined_call_operand.vmem [shape: bf16[16,40], index: 1, kind: input, shape index: {}]
  %s2 = inlined_call_operand.vmem [shape: f32[16,1], index: 2, kind: input, shape index: {}]
  %s3 = inlined_call_operand.hbm [shape: f32[2,16,256], index: 3, kind: output, shape index: {}]
  %s4 = sld [smem:[#allocation0]]
  $region49: #{tpu_custom_call.1} parent=0
    _
  %s6 = ssub.s32 1, %s4
  %s7 = scalar_select 0, %s6, %s4
  $region1: #{tpu_custom_call.1} parent=0
    #allocation2 [shape = 'u8[40960]{0}', space=vmem, size = 0xa000, scoped, tag = 'input window, operand 0']
    #allocation3 [shape = 's32[2]{0}', space=sflag, size = 0x8, scoped, tag = 'scoped memory for tpu_custom_call.1']
    #allocation4 [shape = 's32[2]{0}', space=sflag, size = 0x8, scoped, tag = 'scoped memory for tpu_custom_call.1']
    #allocation5 [shape = 'u8[32768]{0}', space=vmem, size = 0x8000, scoped, tag = 'output window, operand 0']
    %8 = vsyncpa [#allocation3], 0
    %s9 = scalar_lea.sflag [#allocation3], 1
    %10 = vsyncpa %s9, 0
    %11 = vsyncpa [#allocation4], 0
    %s12 = scalar_lea.sflag [#allocation4], 1
    %13 = vsyncpa %s12, 0
    loop: start=0, step=1, limit=4
    $region2: #{tpu_custom_call.1} parent=1 // loop_pre_header
      _
    $region3: #{tpu_custom_call.1} parent=1 // loop_header
      %s15 = sphi 0, %s19
      %p16 = scmp.ge.s32.totalorder %s15, 4
      %s22 = sphi 0, %s34
      %s23 = sphi 0, %s30
      %s24 = sphi 0, %s22
      %s25 = sphi 0, %s23
      %s26 = sphi 0, %s24
      %s27 = sphi 0, %s25
      %s39 = sphi 0, %s41
      %s42 = sphi 0, %s39
      %s43 = sphi 0, %s42
      %s59 = sphi 0, %s43
      %s63 = sphi 0, %s63
      %s65 = sphi 0, %s63
      %s66 = sphi 0, %s65
      %s80 = sphi 0, %s66
      %s84 = sphi 0, %s84
      %s86 = sphi 0, %s84
      %s87 = sphi 0, %s86
      %s101 = sphi 0, %s87
      %s109 = sphi 0, %s111
      %s112 = sphi 0, %s109
      %s113 = sphi 0, %s112
      %s129 = sphi 0, %s113
    $region4: #{tpu_custom_call.1} parent=1 // loop_header_branch
      %18 = sbr.rel (%p16) target = $region8
    $region5: #{tpu_custom_call.1} parent=1 // loop_body
      %s20 = ssub.s32 %s15, 1
      %s21 = ssub.s32 %s15, 2
      %s28 = sadd.s32 1, %s23
      %p29 = scmp.ge.s32.totalorder %s28, 1
      %s30 = scalar_select %p29, 0, %s28
      %s31 = sadd.s32 1, %s22
      %s32 = scalar_select %p29, %s31, %s22
      %p33 = scmp.ge.s32.totalorder %s32, 2
      %s34 = scalar_select %p33, 0, %s32
      %s35 = ssub.s32 %s22, %s34
      %s36 = ssub.s32 %s23, %s30
      %s37 = sor.u32 %s35, %s36
      %p38 = scmp.eq.s32.totalorder %s37, 0
      %s40 = sadd.s32 %s39, 1
      %s41 = scalar_select %p38, %s39, %s40
      %p44 = pneg %p38
      %p45 = scmp.eq.s32.totalorder %s15, 1
      %p46 = por %p44, %p45
      %p47 = scmp.ne.s32.totalorder %s39, %s42
      %p48 = scmp.eq.s32.totalorder %s15, 0
      %p49 = por %p47, %p48
      %p50 = scmp.ne.s32.totalorder %s39, %s42
      %p51 = scmp.eq.s32.totalorder %s20, 1
      %p52 = por %p50, %p51
      %p53 = scmp.ne.s32.totalorder %s42, %s43
      %p54 = scmp.eq.s32.totalorder %s20, 0
      %p55 = por %p53, %p54
      %p56 = scmp.ne.s32.totalorder %s42, %s43
      %p57 = scmp.eq.s32.totalorder %s21, 1
      %p58 = por %p56, %p57
      %p60 = scmp.ne.s32.totalorder %s43, %s59
      %p61 = scmp.eq.s32.totalorder %s21, 0
      %p62 = por %p60, %p61
      %s64 = sadd.s32 %s63, 1
      %p67 = scmp.eq.s32.totalorder %s15, 1
      %p68 = scmp.ne.s32.totalorder %s63, %s65
      %p69 = scmp.eq.s32.totalorder %s15, 0
      %p70 = por %p68, %p69
      %p71 = scmp.ne.s32.totalorder %s63, %s65
      %p72 = scmp.eq.s32.totalorder %s20, 1
      %p73 = por %p71, %p72
      %p74 = scmp.ne.s32.totalorder %s65, %s66
      %p75 = scmp.eq.s32.totalorder %s20, 0
      %p76 = por %p74, %p75
      %p77 = scmp.ne.s32.totalorder %s65, %s66
      %p78 = scmp.eq.s32.totalorder %s21, 1
      %p79 = por %p77, %p78
      %p81 = scmp.ne.s32.totalorder %s66, %s80
      %p82 = scmp.eq.s32.totalorder %s21, 0
      %p83 = por %p81, %p82
      %s85 = sadd.s32 %s84, 1
      %p88 = scmp.eq.s32.totalorder %s15, 1
      %p89 = scmp.ne.s32.totalorder %s84, %s86
      %p90 = scmp.eq.s32.totalorder %s15, 0
      %p91 = por %p89, %p90
      %p92 = scmp.ne.s32.totalorder %s84, %s86
      %p93 = scmp.eq.s32.totalorder %s20, 1
      %p94 = por %p92, %p93
      %p95 = scmp.ne.s32.totalorder %s86, %s87
      %p96 = scmp.eq.s32.totalorder %s20, 0
      %p97 = por %p95, %p96
      %p98 = scmp.ne.s32.totalorder %s86, %s87
      %p99 = scmp.eq.s32.totalorder %s21, 1
      %p100 = por %p98, %p99
      %p102 = scmp.ne.s32.totalorder %s87, %s101
      %p103 = scmp.eq.s32.totalorder %s21, 0
      %p104 = por %p102, %p103
      %s105 = ssub.s32 %s22, %s34
      %s106 = ssub.s32 %s23, %s30
      %s107 = sor.u32 %s105, %s106
      %p108 = scmp.eq.s32.totalorder %s107, 0
      %s110 = sadd.s32 %s109, 1
      %s111 = scalar_select %p108, %s109, %s110
      %p114 = pneg %p108
      %p115 = scmp.eq.s32.totalorder %s15, 1
      %p116 = por %p114, %p115
      %p117 = scmp.ne.s32.totalorder %s109, %s112
      %p118 = scmp.eq.s32.totalorder %s15, 0
      %p119 = por %p117, %p118
      %p120 = scmp.ne.s32.totalorder %s109, %s112
      %p121 = scmp.eq.s32.totalorder %s20, 1
      %p122 = por %p120, %p121
      %p123 = scmp.ne.s32.totalorder %s112, %s113
      %p124 = scmp.eq.s32.totalorder %s20, 0
      %p125 = por %p123, %p124
      %p126 = scmp.ne.s32.totalorder %s112, %s113
      %p127 = scmp.eq.s32.totalorder %s21, 1
      %p128 = por %p126, %p127
      %p130 = scmp.ne.s32.totalorder %s113, %s129
      %p131 = scmp.eq.s32.totalorder %s21, 0
      %p132 = por %p130, %p131
      %p133 = scmp.le.s32.totalorder 1, %s15
      %p134 = scmp.lt.s32.totalorder %s15, 3
      %p135 = pnand %p133, %p134
      %p136 = pneg %p135
      // Predicated region
      $region9: #{tpu_custom_call.1} parent=5 // pred_check
        _
      $region10: #{tpu_custom_call.1} parent=5 // pred_check_branch
        %138 = sbr.rel (%p135) target = $region12
      $region11: #{tpu_custom_call.1} parent=5 // pred_region
        %s139 = ssub.s32 %s15, 1
        // Predicated region
        $region13: #{tpu_custom_call.1} parent=11 // pred_check
          %p140 = pneg %p76
        $region14: #{tpu_custom_call.1} parent=11 // pred_check_branch
          %142 = sbr.rel (%p140) target = $region16
        $region15: #{tpu_custom_call.1} parent=11 // pred_region
          _
        $region16: #{tpu_custom_call.1} parent=11 // pred_fallthru
          _
        // Predicated region
        $region17: #{tpu_custom_call.1} parent=11 // pred_check
          %p143 = pneg %p97
        $region18: #{tpu_custom_call.1} parent=11 // pred_check_branch
          %145 = sbr.rel (%p143) target = $region20
        $region19: #{tpu_custom_call.1} parent=11 // pred_region
          _
        $region20: #{tpu_custom_call.1} parent=11 // pred_fallthru
          _
      $region12: #{tpu_custom_call.1} parent=5 // pred_fallthru
        _
      %p146 = scmp.lt.s32.totalorder %s15, 2
      // Predicated region
      $region21: #{tpu_custom_call.1} parent=5 // pred_check
        %p147 = pneg %p146
      $region22: #{tpu_custom_call.1} parent=5 // pred_check_branch
        %149 = sbr.rel (%p147) target = $region24
      $region23: #{tpu_custom_call.1} parent=5 // pred_region
        // Predicated region
        $region25: #{tpu_custom_call.1} parent=23 // pred_check
          %p150 = pneg %p49
        $region26: #{tpu_custom_call.1} parent=23 // pred_check_branch
          %152 = sbr.rel (%p150) target = $region28
        $region27: #{tpu_custom_call.1} parent=23 // pred_region
          %s153 = sand.u32 %s39, 1
          %s154 = scalar_lea.sflag [#allocation3], %s153
          %s155 = sand.u32 %s39, 1
          %s156 = smul.addr %s155, 40
          %s157 = scalar_lea.vmem [#allocation2], %s156
          %s158 = smul.u32 2, %s23
          %s160 = ssub.s32 640, 640
          %161 = vsyncadd %s154, %s160
          %s162 = smul.addr %s22, 10
          %s163 = sadd.s32 %s158, %s162
          %s164 = smul.addr %s163, 64
          %s165 = scalar_lea.hbm %s0, %s164
          %s166 = sshll.u32 %s157, 4
          %s167 = int_to_ptr.vmem [resolvable:$true] %s166
          %172 = dma.hbm_to_vmem [thread:$0]  %s165, 640, %s167, %s154, 128, 128, 8
        $region28: #{tpu_custom_call.1} parent=23 // pred_fallthru
          _
      $region24: #{tpu_custom_call.1} parent=5 // pred_fallthru
        _
      %p173 = scmp.le.s32.totalorder 1, %s15
      %p174 = scmp.lt.s32.totalorder %s15, 3
      %p175 = pnand %p173, %p174
      %p176 = pneg %p175
      // Predicated region
      $region29: #{tpu_custom_call.1} parent=5 // pred_check
        _
      $region30: #{tpu_custom_call.1} parent=5 // pred_check_branch
        %178 = sbr.rel (%p175) target = $region32
      $region31: #{tpu_custom_call.1} parent=5 // pred_region
        %s179 = ssub.s32 %s15, 1
        %s180 = sand.u32 %s42, 1
        %s181 = scalar_lea.sflag [#allocation3], %s180
        %s182 = sand.u32 %s42, 1
        %s183 = smul.addr %s182, 40
        %s184 = scalar_lea.vmem [#allocation2], %s183
        // Predicated region
        $region33: #{tpu_custom_call.1} parent=31 // pred_check
          %p185 = pneg %p55
        $region34: #{tpu_custom_call.1} parent=31 // pred_check_branch
          %187 = sbr.rel (%p185) target = $region36
        $region35: #{tpu_custom_call.1} parent=31 // pred_region
          %188 = dma.done %s181, 640
        $region36: #{tpu_custom_call.1} parent=31 // pred_fallthru
          _
        %s189 = sand.u32 %s42, 1
        %s190 = scalar_lea.sflag [#allocation3], %s189
        %s191 = sand.u32 %s42, 1
        %s192 = smul.addr %s191, 40
        %s193 = scalar_lea.vmem [#allocation2], %s192
        %p194 = pneg %p55
        %p195 = pneg %p52
        %p196 = pneg %p76
        %p197 = pneg %p73
        %p198 = pneg %p97
        %p199 = pneg %p94
        %p200 = pneg %p125
        %p201 = pneg %p122
        %s202 = sand.u32 %s112, 1
        %s203 = scalar_lea.sflag [#allocation4], %s202
        %s204 = sand.u32 %s112, 1
        %s205 = smul.addr %s204, 32
        %s206 = scalar_lea.vmem [#allocation5], %s205
        %s207 = smul.u32 2, %s25
        %s208 = smul.u32 2, %s25
        %v210 = vld [vmem:[%s1] sm:$0xf]
        %v211 = vld [vmem:[%s1 + $0x4] sm:$0xf]
        %v212 = vld [vmem:[%s184] sm:$0xff]
        %v213 = vld [vmem:[%s184 + $0x8] sm:$0xff]
        %v214 = vld [vmem:[%s184 + $0x10] sm:$0xff]
        %v215 = vld [vmem:[%s184 + $0x18] sm:$0xff]
        %v216 = vld [vmem:[%s184 + $0x20] sm:$0xff]
        %v217 = vld [vmem:[%s2] sm:$0xff]
        %v218 = vld [vmem:[%s2 + $0x8] sm:$0xff]
        %220 = vset.pattern.permute.xlu0 0
        %221 = vperm.xlu0 %220, %v217
        %v222 = vpop.permute.xlu0 %221
        %225 = vset.pattern.permute.xlu0 0
        %226 = vperm.xlu0 %225, %v218
        %v227 = vpop.permute.xlu0 %226
        %v231 = vunpack.c.l.b16 %v210
        %v232 = vunpack.c.l.b16 %v211
        %v233 = vpack.c.b16 %v232, %v231
        %v239 = vunpack.c.l.b16 %v212
        %v240 = vunpack.c.h.b16 %v212
        %v241 = vunpack.c.l.b16 %v213
        %v242 = vunpack.c.h.b16 %v213
        %v243 = vunpack.c.l.b16 %v214
        %v244 = vunpack.c.h.b16 %v214
        %v245 = vunpack.c.l.b16 %v215
        %v246 = vunpack.c.h.b16 %v215
        %v247 = vunpack.c.l.b16 %v216
        %v248 = vunpack.c.h.b16 %v216
        %v249 = vpack.c.b16 %v241, %v239
        %v250 = vpack.c.b16 %v242, %v240
        %v251 = vpack.c.b16 %v245, %v243
        %v252 = vpack.c.b16 %v246, %v244
        %v253 = vpack.c.b16 %v247, %v247
        %v254 = vpack.c.b16 %v248, %v248
        %vm259 = vcmask 326656
        %v261 = vsel %vm259, %v233, 0
        %vm263 = vcmask 1043456
        %v265 = vsel %vm263, %v253, 0
        %v268 = vsel %vm263, %v254, 0
        %270 = vmatprep.subr.bf16.mxu0 %v250
        %271 = vmatpush1.bf16.msra.mxu0 %v249
        %272 = vmatprep.subr.bf16.mxu0 %v252
        %273 = vmatpush1.bf16.msra.mxu0 %v251
        %274 = vmatprep.subr.bf16.mxu0 %v268
        %275 = vmatpush1.bf16.msra.mxu0 %v265
        %276 = vmatprep.subr.bf16.mxu0 0
        %277 = vmatpush1.bf16.msra.mxu0 0
        %278 = vmatprep.subr.bf16.mxu0 0
        %279 = vmatpush1.bf16.msra.mxu0 0
        %280 = vmatprep.subr.bf16.mxu0 0
        %281 = vmatpush1.bf16.msra.mxu0 0
        %282 = vmatprep.subr.bf16.mxu0 0
        %283 = vmatpush1.bf16.msra.mxu0 0
        %284 = vmatprep.subr.bf16.mxu0 0
        %285 = vmatpush1.bf16.msra.mxu0 0
        %286 = vmatprep.subr.bf16.mxu0 0
        %287 = vmatpush1.bf16.msra.mxu0 0
        %288 = vmatprep.subr.bf16.mxu0 0
        %289 = vmatpush1.bf16.msra.mxu0 0
        %290 = vmatprep.subr.bf16.mxu0 0
        %291 = vmatpush1.bf16.msra.mxu0 0
        %292 = vmatprep.subr.bf16.mxu0 0
        %293 = vmatpush1.bf16.msra.mxu0 0
        %294 = vmatprep.subr.bf16.mxu0 0
        %295 = vmatpush1.bf16.msra.mxu0 0
        %296 = vmatprep.subr.bf16.mxu0 0
        %297 = vmatpush1.bf16.msra.mxu0 0
        %298 = vmatprep.subr.bf16.mxu0 0
        %299 = vmatpush1.bf16.msra.mxu0 0
        %300 = vmatprep.subr.bf16.mxu0 0
        %301 = vmatpush1.bf16.msra.mxu0 0
        %302 = vmatprep.mubr.bf16.mxu0 0
        %303 = vmatmul.mubr.bf16.gmra.mrb[0].mxu0 %v261
        %v304 = vpop.f32.mrb[0].mxu0
        %v305 = vadd.f32 %v222, %v304
        %v306 = vpop.f32.mrb[0].mxu0
        %v307 = vadd.f32 %v222, %v306
        %v308 = vpop.f32.mrb[0].mxu0
        %v309 = vadd.f32 %v227, %v308
        %v310 = vpop.f32.mrb[0].mxu0
        %v311 = vadd.f32 %v227, %v310
        %312 = vdwg.mxu0
        %313 = vst [vmem:[%s206] sm:$0xff] %v305
        %314 = vst [vmem:[%s206 + $0x8] sm:$0xff] %v307
        %315 = vst [vmem:[%s206 + $0x10] sm:$0xff] %v309
        %316 = vst [vmem:[%s206 + $0x18] sm:$0xff] %v311
        %s317 = sand.u32 %s112, 1
        %s318 = scalar_lea.sflag [#allocation4], %s317
        %s319 = sand.u32 %s112, 1
        %s320 = smul.addr %s319, 32
        %s321 = scalar_lea.vmem [#allocation5], %s320
        // Predicated region
        $region37: #{tpu_custom_call.1} parent=31 // pred_check
          %p322 = pneg %p122
        $region38: #{tpu_custom_call.1} parent=31 // pred_check_branch
          %324 = sbr.rel (%p322) target = $region40
        $region39: #{tpu_custom_call.1} parent=31 // pred_region
          %s325 = smul.u32 2, %s25
          %s327 = ssub.s32 512, 512
          %328 = vsyncadd %s318, %s327
          %s329 = smul.addr %s24, 4
          %s330 = sadd.s32 %s325, %s329
          %s331 = smul.addr %s330, 128
          %s332 = scalar_lea.hbm %s3, %s331
          %s333 = sshll.u32 %s321, 4
          %s334 = int_to_ptr.vmem [resolvable:$true] %s333
          %339 = dma.vmem_to_hbm [thread:$0]  %s334, 512, %s332, %s318, 256, 256, 16
        $region40: #{tpu_custom_call.1} parent=31 // pred_fallthru
          _
      $region32: #{tpu_custom_call.1} parent=5 // pred_fallthru
        _
      %p340 = scmp.le.s32.totalorder 2, %s15
      // Predicated region
      $region41: #{tpu_custom_call.1} parent=5 // pred_check
        %p341 = pneg %p340
      $region42: #{tpu_custom_call.1} parent=5 // pred_check_branch
        %343 = sbr.rel (%p341) target = $region44
      $region43: #{tpu_custom_call.1} parent=5 // pred_region
        %s344 = ssub.s32 %s15, 2
        // Predicated region
        $region45: #{tpu_custom_call.1} parent=43 // pred_check
          %p345 = pneg %p128
        $region46: #{tpu_custom_call.1} parent=43 // pred_check_branch
          %347 = sbr.rel (%p345) target = $region48
        $region47: #{tpu_custom_call.1} parent=43 // pred_region
          %s348 = sand.u32 %s113, 1
          %s349 = scalar_lea.sflag [#allocation4], %s348
          %s350 = sand.u32 %s113, 1
          %s351 = smul.addr %s350, 32
          %s352 = scalar_lea.vmem [#allocation5], %s351
          %353 = dma.done %s349, 512
        $region48: #{tpu_custom_call.1} parent=43 // pred_fallthru
          _
      $region44: #{tpu_custom_call.1} parent=5 // pred_fallthru
        _
    $region6: #{tpu_custom_call.1} parent=1 // loop_footer
      %s19 = sadd.s32 1, %s15
    $region7: #{tpu_custom_call.1} parent=1 // loop_footer_branch
      %14 = sbr.rel target = $region3
    $region8: #{tpu_custom_call.1} parent=1 // loop_exit
      _
    %354 = vsyncpa [#allocation3], 1
    %s355 = scalar_lea.sflag [#allocation3], 1
    %356 = vsyncpa %s355, 1
    %357 = vsyncpa [#allocation4], 1
    %s358 = scalar_lea.sflag [#allocation4], 1
    %359 = vsyncpa %s358, 1

</llo_original>
